<compile_context>
chip_gen: v6e
topology: v6e:2x2x1
jax: 0.10.0
libtpu: 0.0.40
codegen_flags: <defaults>
</compile_context>

<pallas_src>
import math

import jax
import jax.numpy as jnp
from jax.experimental import pallas as pl
from jax.experimental.pallas import tpu as pltpu

# ---------------- model dimensions (Loco.__init__) ----------------
INPUT_SIZE = 34          # 17 keypoints * (x, y)
OUTPUT_SIZE = 9          # LocoModel output_size=9 -> 8 "fin" + 1 "aux"
LINEAR_SIZE = 256        # Loco.LINEAR_SIZE_MONO
NUM_STAGE = 1
BN_EPS = 1e-5

OUT_PAD = 128            # lane-dense output block (only cols 0..8 carry data)


# ---------------- Pallas kernel: the LocoModel MLP ----------------
def loco_mlp_kernel(x_ref, w1_ref, wh_ref, t_ref, whd_ref, bout_ref, o_ref):
    f32 = jnp.float32
    bf16 = jnp.bfloat16

    x = x_ref[...].astype(bf16)                       # (TM, 34)

    # w1 (+ folded BN1) + relu   (dropout = identity in eval mode)
    y1 = jnp.maximum(
        jnp.dot(x, w1_ref[...], preferred_element_type=f32) + t_ref[0:1, :], 0.0)

    # residual stage (MyLinearSimple), BN folded into weights
    h = jnp.maximum(
        jnp.dot(y1.astype(bf16), wh_ref[0], preferred_element_type=f32)
        + t_ref[1:2, :], 0.0)
    h = jnp.maximum(
        jnp.dot(h.astype(bf16), wh_ref[1], preferred_element_type=f32)
        + t_ref[2:3, :], 0.0)
    y2 = y1 + h

    # w3 (+ folded BN3) + relu (fin head input); aux head reads y2 directly
    y3 = jnp.maximum(
        jnp.dot(y2.astype(bf16), wh_ref[2], preferred_element_type=f32)
        + t_ref[3:4, :], 0.0)

    # split heads: two (TM,256)x(256,128) matmuls, no (TM,512) concat temp.
    #   whd[0] = W_fin (cols 0:8, applied to y3); whd[1] = W_aux (col 8, applied to y2)
    out = jnp.dot(y3.astype(bf16), whd_ref[0], preferred_element_type=f32)
    out = out + jnp.dot(y2.astype(bf16), whd_ref[1], preferred_element_type=f32)
    o_ref[...] = out + bout_ref[...]


def loco_mlp(x, params):
    """x: (m, 34) float32 -> (m, 9) float32."""
    m = x.shape[0]
    W1, WH, T, WHD, BOUT = params

    # Row tiling:
    #  * tiny batches  (< 128 padded rows): one tile -> weight-DMA / launch bound anyway
    #  * medium batches: ~half the rows per tile (multiple of 8) so the grid has
    #    >= 2 steps and the "parallel" axis shards rows across both TCs on v7x
    #  * large batches: TM = 1024 to amortize per-step overhead / fill the MXU
    m_pad8 = max(8, -(-m // 8) * 8)
    if m_pad8 >= 2048:
        TM = 1024
    elif m_pad8 >= 128:
        TM = min(1024, (-(-m_pad8 // 16)) * 8)
    else:
        TM = m_pad8
    m_pad = -(-m // TM) * TM

    x_pad = x if m_pad == m else jnp.pad(x, ((0, m_pad - m), (0, 0)))

    out = pl.pallas_call(
        loco_mlp_kernel,
        out_shape=jax.ShapeDtypeStruct((m_pad, OUT_PAD), jnp.float32),
        grid=(m_pad // TM,),
        in_specs=[
            pl.BlockSpec((TM, INPUT_SIZE), lambda i: (i, 0)),  # activations: rows tiled, 34 = full dim
            pl.BlockSpec(W1.shape, lambda i: (0, 0)),          # weights: constant block idx
            pl.BlockSpec(WH.shape, lambda i: (0, 0, 0)),       #   -> stay resident across grid steps
            pl.BlockSpec(T.shape, lambda i: (0, 0)),
            pl.BlockSpec(WHD.shape, lambda i: (0, 0, 0)),
            pl.BlockSpec(BOUT.shape, lambda i: (0, 0)),
        ],
        out_specs=pl.BlockSpec((TM, OUT_PAD), lambda i: (i, 0)),
        compiler_params=pltpu.CompilerParams(
            dimension_semantics=("parallel",),
            vmem_limit_bytes=32 << 20),
    )(x_pad, W1, WH, T, WHD, BOUT)
    return out[:m, :OUTPUT_SIZE]


# ---------------- deterministic parameter init (BN folded, bf16 weights) ----------------
def init_params(key):
    H = LINEAR_SIZE
    ks = jax.random.split(key, 16)
    nrm = lambda k, shp: 0.05 * jax.random.normal(k, shp, jnp.float32)

    def bn(k):
        k1, k2, k3, k4 = jax.random.split(k, 4)
        gamma = 1.0 + 0.05 * jax.random.normal(k1, (H,), jnp.float32)
        beta = 0.05 * jax.random.normal(k2, (H,), jnp.float32)
        mean = 0.05 * jax.random.normal(k3, (H,), jnp.float32)
        var = 1.0 + 0.1 * jax.random.uniform(k4, (H,), jnp.float32)
        return gamma, beta, mean, var

    def fold(w, b, bn_p):
        """Fold Linear (w,b) + eval-mode BatchNorm into scaled weight + shift."""
        gamma, beta, mean, var = bn_p
        s = gamma / jnp.sqrt(var + BN_EPS)
        return w * s[None, :], (b - mean) * s + beta

    # w1: 34 -> H (+ BN1)
    w1, t1 = fold(nrm(ks[0], (INPUT_SIZE, H)), nrm(ks[1], (H,)), bn(ks[2]))
    # residual stage (MyLinearSimple): two Linear+BN
    sw1, ts1 = fold(nrm(ks[3], (H, H)), nrm(ks[4], (H,)), bn(ks[5]))
    sw2, ts2 = fold(nrm(ks[6], (H, H)), nrm(ks[7], (H,)), bn(ks[8]))
    # w3 + BN3
    w3, t3 = fold(nrm(ks[9], (H, H)), nrm(ks[10], (H,)), bn(ks[11]))
    # heads (no BN)
    w_fin = nrm(ks[12], (H, OUTPUT_SIZE - 1))
    b_fin = nrm(ks[13], (OUTPUT_SIZE - 1,))
    w_aux = nrm(ks[14], (H, 1))
    b_aux = nrm(ks[15], (1,))

    # consolidated parameter tensors (weights bf16, shifts/bias f32)
    W1 = w1.astype(jnp.bfloat16)                                      # (34, 256) bf16
    WH = jnp.stack([sw1, sw2, w3]).astype(jnp.bfloat16)               # (3, 256, 256) bf16
    T = jnp.stack([t1, ts1, ts2, t3]).astype(jnp.float32)             # (4, 256) f32
    WHD = jnp.zeros((2, H, OUT_PAD), jnp.float32)
    WHD = WHD.at[0, :, :OUTPUT_SIZE - 1].set(w_fin)                   # fin head (uses y3) -> cols 0..7
    WHD = WHD.at[1, :, OUTPUT_SIZE - 1:OUTPUT_SIZE].set(w_aux)        # aux head (uses y2) -> col 8
    WHD = WHD.astype(jnp.bfloat16)                                    # (2, 256, 128) bf16
    BOUT = jnp.zeros((1, OUT_PAD), jnp.float32)
    BOUT = BOUT.at[0, :OUTPUT_SIZE - 1].set(b_fin).at[0, OUTPUT_SIZE - 1].set(b_aux[0])

    return [W1, WH, T, WHD, BOUT]


# ---------------- JAX glue: preprocess / extract / post-process ----------------
def preprocess_monoloco_jax(keypoints, kk):
    """keypoints (m,3,17), kk (3,3) -> (m,34) normalized camera coords at z=10."""
    kps_in = keypoints[:, 0:2, :]                                # (m,2,17)
    kk_inv = jnp.linalg.inv(kk)
    uv_all = jnp.transpose(kps_in, (0, 2, 1))                    # (m,17,2)
    uv_pad = jnp.concatenate(
        [uv_all, jnp.ones(uv_all.shape[:2] + (1,), uv_all.dtype)], axis=-1)
    xy1_all = jnp.matmul(uv_pad, kk_inv.T) * 10.0                # (m,17,3)
    return xy1_all[:, :, 0:2].reshape(keypoints.shape[0], -1)    # (m,34)


def extract_outputs_jax(outputs):
    bi = jnp.exp(outputs[:, 3:4]) * outputs[:, 2:3]
    r, t, p = outputs[:, 2], outputs[:, 0], outputs[:, 1]
    x = (r * jnp.sin(p) * jnp.cos(t))[:, None]
    y = (r * jnp.cos(p))[:, None]
    d = outputs[:, 2:3]
    z = jnp.sqrt(jnp.maximum(d ** 2 - x ** 2 - y ** 2, 0.0))
    xyzd = jnp.concatenate([x, y, z, d], axis=1)
    yaw_pred = jnp.arctan2(outputs[:, 7:8], outputs[:, 8:9])
    corr = jnp.arctan2(xyzd[:, 0], xyzd[:, 2])[:, None]
    yaw_orig = yaw_pred + corr
    yaw_orig = jnp.where(yaw_orig > math.pi, yaw_orig - 2 * math.pi, yaw_orig)
    yaw_orig = jnp.where(yaw_orig < -math.pi, yaw_orig + 2 * math.pi, yaw_orig)
    return {'h': outputs[:, 4:5], 'w': outputs[:, 5:6], 'l': outputs[:, 6:7],
            'ori': outputs[:, 7:9], 'bi': bi, 'xyzd': xyzd, 'd': d,
            'yaw': (yaw_pred, yaw_orig)}


def post_process_jax(dic_in, boxes, keypoints, kk):
    # TODO(synk): ground-truth IoU matching / python dict-of-lists bookkeeping of
    # the original post_process is host-side and not a tensor hot path; only the
    # dic_gt=None branch is implemented, vectorized.
    kps_in = keypoints[:, 0:2, :]
    uv_shoulders = kps_in[:, :, 5:7].mean(axis=2)
    uv_heads = kps_in[:, :, 0:5].mean(axis=2)
    kmax, kmin = kps_in.max(axis=2), kps_in.min(axis=2)
    uv_centers = (kmax - kmin) / 2 + kmin
    kk_inv = jnp.linalg.inv(kk)
    uv_pad = jnp.concatenate([uv_centers, jnp.ones((uv_centers.shape[0], 1))], axis=-1)
    xy_centers = jnp.matmul(uv_pad, kk_inv.T) * 1.0
    dd = dic_in['d']
    denom = jnp.sqrt(1.0 + xy_centers[:, 0:1] ** 2 + xy_centers[:, 1:2] ** 2)
    xyz_pred = xy_centers * dd / denom
    distance = jnp.sqrt(jnp.sum(xyz_pred ** 2, axis=-1, keepdims=True))
    conf = 0.035 * boxes[:, -1:] / (dic_in['bi'] / distance)
    return {'boxes': boxes, 'confs': conf, 'dds_pred': dd,
            'stds_ale': dic_in['bi'], 'stds_epi': jnp.zeros_like(dd),
            'xyz_pred': xyz_pred, 'uv_kps': keypoints,
            'uv_centers': jnp.round(uv_centers),
            'uv_shoulders': jnp.round(uv_shoulders),
            'uv_heads': jnp.round(uv_heads),
            'angles': dic_in['yaw'][0], 'angles_egocentric': dic_in['yaw'][1]}


def loco_forward(keypoints, kk, boxes, params):
    inputs = preprocess_monoloco_jax(keypoints, kk)       # (m, 34)
    outputs = loco_mlp(inputs, params)                    # (m, 9)  -- Pallas kernel
    dic_out = extract_outputs_jax(outputs)
    dic_out['epi'] = jnp.zeros((outputs.shape[0], 1), jnp.float32)
    return post_process_jax(dic_out, boxes, keypoints, kk)


# ---------------- main ----------------
if __name__ == "__main__":
    key = jax.random.PRNGKey(0)
    k_par, k_u, k_v, k_c, k_box = jax.random.split(key, 5)

    params = init_params(k_par)

    m = 6  # number of detected people
    u = jax.random.uniform(k_u, (m, 1, 17), jnp.float32, 100.0, 540.0)
    v = jax.random.uniform(k_v, (m, 1, 17), jnp.float32, 80.0, 400.0)
    c = jax.random.uniform(k_c, (m, 1, 17), jnp.float32, 0.3, 1.0)
    keypoints = jnp.concatenate([u, v, c], axis=1)        # (m, 3, 17)

    kk = jnp.array([[500.0, 0.0, 320.0],
                    [0.0, 500.0, 240.0],
                    [0.0, 0.0, 1.0]], jnp.float32)

    b = jax.random.uniform(k_box, (m, 4), jnp.float32, 0.0, 600.0)
    boxes = jnp.concatenate(
        [jnp.minimum(b[:, 0:2], b[:, 2:4]), jnp.maximum(b[:, 0:2], b[:, 2:4]),
         jax.random.uniform(key, (m, 1), jnp.float32, 0.5, 1.0)], axis=1)  # (m, 5)

    dic_out = loco_forward(keypoints, kk, boxes, params)
    jax.block_until_ready(dic_out['xyz_pred'])
    jax.block_until_ready(dic_out['confs'])
    print("KERNEL_OK")
</pallas_src>

<mosaic_0001>
module attributes {stable_mosaic.version = 11 : i64} {
  func.func @loco_mlp_kernel(%arg0: i32, %arg1: memref<8x34xf32, #tpu.memory_space<vmem>>, %arg2: memref<34x256xbf16, #tpu.memory_space<vmem>>, %arg3: memref<3x256x256xbf16, #tpu.memory_space<vmem>>, %arg4: memref<4x256xf32, #tpu.memory_space<vmem>>, %arg5: memref<2x256x128xbf16, #tpu.memory_space<vmem>>, %arg6: memref<1x128xf32, #tpu.memory_space<vmem>>, %arg7: memref<8x128xf32, #tpu.memory_space<vmem>>) attributes {dimension_semantics = [#tpu.dimension_semantics<parallel>], iteration_bounds = array<i64: 1>, scalar_prefetch = 0 : i64, scratch_operands = 0 : i64, tpu.core_type = #tpu.core_type<tc>, window_params = [{transform_indices = @transform_0, window_bounds = array<i64: 8, 34>}, {pipeline_mode = #tpu.pipeline_mode<synchronous>, transform_indices = @transform_1, window_bounds = array<i64: 34, 256>}, {pipeline_mode = #tpu.pipeline_mode<synchronous>, transform_indices = @transform_2, window_bounds = array<i64: 3, 256, 256>}, {pipeline_mode = #tpu.pipeline_mode<synchronous>, transform_indices = @transform_3, window_bounds = array<i64: 4, 256>}, {pipeline_mode = #tpu.pipeline_mode<synchronous>, transform_indices = @transform_4, window_bounds = array<i64: 2, 256, 128>}, {pipeline_mode = #tpu.pipeline_mode<synchronous>, transform_indices = @transform_5, window_bounds = array<i64: 1, 128>}, {transform_indices = @transform_6, window_bounds = array<i64: 8, 128>}]} {
    %c0 = arith.constant 0 : index
    %c0_0 = arith.constant 0 : index
    %0 = vector.load %arg1[%c0, %c0_0] : memref<8x34xf32, #tpu.memory_space<vmem>>, vector<8x34xf32>
    %1 = arith.truncf %0 : vector<8x34xf32> to vector<8x34xbf16>
    %c0_1 = arith.constant 0 : index
    %c0_2 = arith.constant 0 : index
    %2 = vector.load %arg2[%c0_1, %c0_2] : memref<34x256xbf16, #tpu.memory_space<vmem>>, vector<34x256xbf16>
    %cst = arith.constant dense<0.000000e+00> : vector<8x256xf32>
    %3 = tpu.matmul %1, %2, %cst {dimension_numbers = #tpu.dot_dimension_numbers<[1], [0], [0], [1], [0, 0, 1, 1], [], []>} : vector<8x34xbf16>, vector<34x256xbf16>, vector<8x256xf32> -> vector<8x256xf32>
    %c0_3 = arith.constant 0 : index
    %c0_4 = arith.constant 0 : index
    %4 = vector.load %arg4[%c0_3, %c0_4] : memref<4x256xf32, #tpu.memory_space<vmem>>, vector<1x256xf32>
    %5 = vector.broadcast %4 : vector<1x256xf32> to vector<8x256xf32>
    %6 = arith.addf %3, %5 : vector<8x256xf32>
    %cst_5 = arith.constant 0.000000e+00 : f32
    %7 = vector.broadcast %cst_5 : f32 to vector<8x256xf32>
    %8 = arith.maximumf %6, %7 : vector<8x256xf32>
    %9 = arith.truncf %8 : vector<8x256xf32> to vector<8x256xbf16>
    %c0_6 = arith.constant 0 : index
    %c0_7 = arith.constant 0 : index
    %c0_8 = arith.constant 0 : index
    %10 = vector.load %arg3[%c0_6, %c0_7, %c0_8] : memref<3x256x256xbf16, #tpu.memory_space<vmem>>, vector<1x256x256xbf16>
    %11 = vector.shape_cast %10 : vector<1x256x256xbf16> to vector<256x256xbf16>
    %cst_9 = arith.constant dense<0.000000e+00> : vector<8x256xf32>
    %12 = tpu.matmul %9, %11, %cst_9 {dimension_numbers = #tpu.dot_dimension_numbers<[1], [0], [0], [1], [0, 0, 1, 1], [], []>} : vector<8x256xbf16>, vector<256x256xbf16>, vector<8x256xf32> -> vector<8x256xf32>
    %c1 = arith.constant 1 : index
    %c0_10 = arith.constant 0 : index
    %13 = vector.load %arg4[%c1, %c0_10] : memref<4x256xf32, #tpu.memory_space<vmem>>, vector<1x256xf32>
    %14 = vector.broadcast %13 : vector<1x256xf32> to vector<8x256xf32>
    %15 = arith.addf %12, %14 : vector<8x256xf32>
    %cst_11 = arith.constant 0.000000e+00 : f32
    %16 = vector.broadcast %cst_11 : f32 to vector<8x256xf32>
    %17 = arith.maximumf %15, %16 : vector<8x256xf32>
    %18 = arith.truncf %17 : vector<8x256xf32> to vector<8x256xbf16>
    %c1_12 = arith.constant 1 : index
    %c0_13 = arith.constant 0 : index
    %c0_14 = arith.constant 0 : index
    %19 = vector.load %arg3[%c1_12, %c0_13, %c0_14] : memref<3x256x256xbf16, #tpu.memory_space<vmem>>, vector<1x256x256xbf16>
    %20 = vector.shape_cast %19 : vector<1x256x256xbf16> to vector<256x256xbf16>
    %cst_15 = arith.constant dense<0.000000e+00> : vector<8x256xf32>
    %21 = tpu.matmul %18, %20, %cst_15 {dimension_numbers = #tpu.dot_dimension_numbers<[1], [0], [0], [1], [0, 0, 1, 1], [], []>} : vector<8x256xbf16>, vector<256x256xbf16>, vector<8x256xf32> -> vector<8x256xf32>
    %c2 = arith.constant 2 : index
    %c0_16 = arith.constant 0 : index
    %22 = vector.load %arg4[%c2, %c0_16] : memref<4x256xf32, #tpu.memory_space<vmem>>, vector<1x256xf32>
    %23 = vector.broadcast %22 : vector<1x256xf32> to vector<8x256xf32>
    %24 = arith.addf %21, %23 : vector<8x256xf32>
    %cst_17 = arith.constant 0.000000e+00 : f32
    %25 = vector.broadcast %cst_17 : f32 to vector<8x256xf32>
    %26 = arith.maximumf %24, %25 : vector<8x256xf32>
    %27 = arith.addf %8, %26 : vector<8x256xf32>
    %28 = arith.truncf %27 : vector<8x256xf32> to vector<8x256xbf16>
    %c2_18 = arith.constant 2 : index
    %c0_19 = arith.constant 0 : index
    %c0_20 = arith.constant 0 : index
    %29 = vector.load %arg3[%c2_18, %c0_19, %c0_20] : memref<3x256x256xbf16, #tpu.memory_space<vmem>>, vector<1x256x256xbf16>
    %30 = vector.shape_cast %29 : vector<1x256x256xbf16> to vector<256x256xbf16>
    %cst_21 = arith.constant dense<0.000000e+00> : vector<8x256xf32>
    %31 = tpu.matmul %28, %30, %cst_21 {dimension_numbers = #tpu.dot_dimension_numbers<[1], [0], [0], [1], [0, 0, 1, 1], [], []>} : vector<8x256xbf16>, vector<256x256xbf16>, vector<8x256xf32> -> vector<8x256xf32>
    %c3 = arith.constant 3 : index
    %c0_22 = arith.constant 0 : index
    %32 = vector.load %arg4[%c3, %c0_22] : memref<4x256xf32, #tpu.memory_space<vmem>>, vector<1x256xf32>
    %33 = vector.broadcast %32 : vector<1x256xf32> to vector<8x256xf32>
    %34 = arith.addf %31, %33 : vector<8x256xf32>
    %cst_23 = arith.constant 0.000000e+00 : f32
    %35 = vector.broadcast %cst_23 : f32 to vector<8x256xf32>
    %36 = arith.maximumf %34, %35 : vector<8x256xf32>
    %37 = arith.truncf %36 : vector<8x256xf32> to vector<8x256xbf16>
    %c0_24 = arith.constant 0 : index
    %c0_25 = arith.constant 0 : index
    %c0_26 = arith.constant 0 : index
    %38 = vector.load %arg5[%c0_24, %c0_25, %c0_26] : memref<2x256x128xbf16, #tpu.memory_space<vmem>>, vector<1x256x128xbf16>
    %39 = vector.shape_cast %38 : vector<1x256x128xbf16> to vector<256x128xbf16>
    %cst_27 = arith.constant dense<0.000000e+00> : vector<8x128xf32>
    %40 = tpu.matmul %37, %39, %cst_27 {dimension_numbers = #tpu.dot_dimension_numbers<[1], [0], [0], [1], [0, 0, 1, 1], [], []>} : vector<8x256xbf16>, vector<256x128xbf16>, vector<8x128xf32> -> vector<8x128xf32>
    %41 = arith.truncf %27 : vector<8x256xf32> to vector<8x256xbf16>
    %c1_28 = arith.constant 1 : index
    %c0_29 = arith.constant 0 : index
    %c0_30 = arith.constant 0 : index
    %42 = vector.load %arg5[%c1_28, %c0_29, %c0_30] : memref<2x256x128xbf16, #tpu.memory_space<vmem>>, vector<1x256x128xbf16>
    %43 = vector.shape_cast %42 : vector<1x256x128xbf16> to vector<256x128xbf16>
    %cst_31 = arith.constant dense<0.000000e+00> : vector<8x128xf32>
    %44 = tpu.matmul %41, %43, %cst_31 {dimension_numbers = #tpu.dot_dimension_numbers<[1], [0], [0], [1], [0, 0, 1, 1], [], []>} : vector<8x256xbf16>, vector<256x128xbf16>, vector<8x128xf32> -> vector<8x128xf32>
    %45 = arith.addf %40, %44 : vector<8x128xf32>
    %c0_32 = arith.constant 0 : index
    %c0_33 = arith.constant 0 : index
    %46 = vector.load %arg6[%c0_32, %c0_33] : memref<1x128xf32, #tpu.memory_space<vmem>>, vector<1x128xf32>
    %47 = vector.broadcast %46 : vector<1x128xf32> to vector<8x128xf32>
    %48 = arith.addf %45, %47 : vector<8x128xf32>
    %c0_34 = arith.constant 0 : index
    %c0_35 = arith.constant 0 : index
    %49 = vector.load %arg7[%c0_34, %c0_35] : memref<8x128xf32, #tpu.memory_space<vmem>>, vector<8x128xf32>
    tpu.vector_store %arg7[%c0_34, %c0_35], %48 {strides = array<i32>} : memref<8x128xf32, #tpu.memory_space<vmem>>, vector<8x128xf32>,
    return
  }
  func.func @transform_0(%arg0: i32) -> (i32, i32) {
    %c0_i32 = arith.constant 0 : i32
    %c0_i32_0 = arith.constant 0 : i32
    return %arg0, %c0_i32 : i32, i32
  }
  func.func @transform_1(%arg0: i32) -> (i32, i32) {
    %c0_i32 = arith.constant 0 : i32
    %c0_i32_0 = arith.constant 0 : i32
    %c0_i32_1 = arith.constant 0 : i32
    return %c0_i32, %c0_i32_0 : i32, i32
  }
  func.func @transform_2(%arg0: i32) -> (i32, i32, i32) {
    %c0_i32 = arith.constant 0 : i32
    %c0_i32_0 = arith.constant 0 : i32
    %c0_i32_1 = arith.constant 0 : i32
    %c0_i32_2 = arith.constant 0 : i32
    return %c0_i32, %c0_i32_0, %c0_i32_1 : i32, i32, i32
  }
  func.func @transform_3(%arg0: i32) -> (i32, i32) {
    %c0_i32 = arith.constant 0 : i32
    %c0_i32_0 = arith.constant 0 : i32
    %c0_i32_1 = arith.constant 0 : i32
    return %c0_i32, %c0_i32_0 : i32, i32
  }
  func.func @transform_4(%arg0: i32) -> (i32, i32, i32) {
    %c0_i32 = arith.constant 0 : i32
    %c0_i32_0 = arith.constant 0 : i32
    %c0_i32_1 = arith.constant 0 : i32
    %c0_i32_2 = arith.constant 0 : i32
    return %c0_i32, %c0_i32_0, %c0_i32_1 : i32, i32, i32
  }
  func.func @transform_5(%arg0: i32) -> (i32, i32) {
    %c0_i32 = arith.constant 0 : i32
    %c0_i32_0 = arith.constant 0 : i32
    %c0_i32_1 = arith.constant 0 : i32
    return %c0_i32, %c0_i32_0 : i32, i32
  }
  func.func @transform_6(%arg0: i32) -> (i32, i32) {
    %c0_i32 = arith.constant 0 : i32
    %c0_i32_0 = arith.constant 0 : i32
    return %arg0, %c0_i32 : i32, i32
  }
}

</mosaic_0001>

<llo_original>
// kernel: tpu_custom_call.1
$region0: #{tpu_custom_call.1}
  #allocation0 [shape = 'u32[]', space=smem, size = 0x4, offset = 0x4, fixed_abs, tag = 'smem constant byte address 0x4 - core index']
  #allocation1 [shape = 'u32[144,128]{1,0:T(1,128)}', space=vmem, size = 0x12000, scoped, tag = 'internal scratch']
  %s0 = inlined_call_operand.hbm [shape: f32[8,34], index: 0, kind: input, shape index: {}]
  %s1 = inlined_call_operand.hbm [shape: bf16[34,256], index: 1, kind: input, shape index: {}]
  %s2 = inlined_call_operand.hbm [shape: bf16[3,256,256], index: 2, kind: input, shape index: {}]
  %s3 = inlined_call_operand.hbm [shape: f32[4,256], index: 3, kind: input, shape index: {}]
  %s4 = inlined_call_operand.hbm [shape: bf16[2,256,128], index: 4, kind: input, shape index: {}]
  %s5 = inlined_call_operand.vmem [shape: f32[1,128], index: 5, kind: input, shape index: {}]
  %s6 = inlined_call_operand.hbm [shape: f32[8,128], index: 6, kind: output, shape index: {}]
  %s7 = sld [smem:[#allocation0]]
  $region54: #{tpu_custom_call.1} parent=0
    _
  %s9 = ssub.s32 1, %s7
  %s10 = scalar_select 0, %s9, %s7
  $region1: #{tpu_custom_call.1} parent=0
    #allocation2 [shape = 'u8[4096]{0}', space=vmem, size = 0x1000, scoped, tag = 'input window, operand 0, single buffered']
    #allocation3 [shape = 's32[1]{0}', space=sflag, size = 0x4, scoped, tag = 'scoped memory for tpu_custom_call.1']
    #allocation4 [shape = 's32[1]{0}', space=sflag, size = 0x4, scoped, tag = 'scoped memory for tpu_custom_call.1']
    #allocation5 [shape = 'u8[20480]{0}', space=vmem, size = 0x5000, scoped, tag = 'input window, operand 1, single buffered']
    #allocation6 [shape = 's32[1]{0}', space=sflag, size = 0x4, scoped, tag = 'scoped memory for tpu_custom_call.1']
    #allocation7 [shape = 'u8[393216]{0}', space=vmem, size = 0x60000, scoped, tag = 'input window, operand 2, single buffered']
    #allocation8 [shape = 'u8[4096]{0}', space=vmem, size = 0x1000, scoped, tag = 'input window, operand 3, single buffered']
    #allocation9 [shape = 's32[1]{0}', space=sflag, size = 0x4, scoped, tag = 'scoped memory for tpu_custom_call.1']
    #allocation10 [shape = 'u8[131072]{0}', space=vmem, size = 0x20000, scoped, tag = 'input window, operand 4, single buffered']
    #allocation11 [shape = 'u8[4096]{0}', space=vmem, size = 0x1000, scoped, tag = 'output window, operand 0, single buffered']
    %11 = vsyncpa [#allocation3], 0
    %12 = vsyncpa [#allocation6], 0
    %13 = vsyncpa [#allocation9], 0
    %14 = vsyncpa [#allocation4], 0
    // Predicated region
    $region2: #{tpu_custom_call.1} parent=1 // pred_check
      _
    $region3: #{tpu_custom_call.1} parent=1 // pred_check_branch
      %16 = sbr.rel (0) target = $region5
    $region4: #{tpu_custom_call.1} parent=1 // pred_region
      %s18 = ssub.s32 128, 128
      %19 = vsyncadd [#allocation3], %s18
      %s21 = sshll.u32 [#allocation2], 4
      %s22 = int_to_ptr.vmem [resolvable:$true] %s21
      %24 = dma.hbm_to_vmem [thread:$0]  %s0, 128, %s22, [#allocation3]
    $region5: #{tpu_custom_call.1} parent=1 // pred_fallthru
      _
    // Predicated region
    $region6: #{tpu_custom_call.1} parent=1 // pred_check
      _
    $region7: #{tpu_custom_call.1} parent=1 // pred_check_branch
      %26 = sbr.rel (0) target = $region9
    $region8: #{tpu_custom_call.1} parent=1 // pred_region
      %s28 = ssub.s32 640, 640
      %29 = vsyncadd [#allocation6], %s28
      %s30 = sshll.u32 [#allocation5], 4
      %s31 = int_to_ptr.vmem [resolvable:$true] %s30
      %36 = dma.hbm_to_vmem [thread:$0]  %s1, 640, %s31, [#allocation6], 128, 128, 8
    $region9: #{tpu_custom_call.1} parent=1 // pred_fallthru
      _
    // Predicated region
    $region10: #{tpu_custom_call.1} parent=1 // pred_check
      _
    $region11: #{tpu_custom_call.1} parent=1 // pred_check_branch
      %38 = sbr.rel (0) target = $region13
    $region12: #{tpu_custom_call.1} parent=1 // pred_region
      %s40 = ssub.s32 12288, 12288
      %41 = vsyncadd [#allocation6], %s40
      %s42 = sshll.u32 [#allocation7], 4
      %s43 = int_to_ptr.vmem [resolvable:$true] %s42
      %48 = dma.hbm_to_vmem [thread:$0]  %s2, 12288, %s43, [#allocation6], 128, 128, 8
    $region13: #{tpu_custom_call.1} parent=1 // pred_fallthru
      _
    // Predicated region
    $region14: #{tpu_custom_call.1} parent=1 // pred_check
      _
    $region15: #{tpu_custom_call.1} parent=1 // pred_check_branch
      %50 = sbr.rel (0) target = $region17
    $region16: #{tpu_custom_call.1} parent=1 // pred_region
      %s52 = ssub.s32 128, 128
      %53 = vsyncadd [#allocation9], %s52
      %s55 = sshll.u32 [#allocation8], 4
      %s56 = int_to_ptr.vmem [resolvable:$true] %s55
      %58 = dma.hbm_to_vmem [thread:$0]  %s3, 128, %s56, [#allocation9]
    $region17: #{tpu_custom_call.1} parent=1 // pred_fallthru
      _
    // Predicated region
    $region18: #{tpu_custom_call.1} parent=1 // pred_check
      _
    $region19: #{tpu_custom_call.1} parent=1 // pred_check_branch
      %60 = sbr.rel (0) target = $region21
    $region20: #{tpu_custom_call.1} parent=1 // pred_region
      %s62 = ssub.s32 4096, 4096
      %63 = vsyncadd [#allocation9], %s62
      %s64 = sshll.u32 [#allocation10], 4
      %s65 = int_to_ptr.vmem [resolvable:$true] %s64
      %70 = dma.hbm_to_vmem [thread:$0]  %s4, 4096, %s65, [#allocation9], 64, 64, 4
    $region21: #{tpu_custom_call.1} parent=1 // pred_fallthru
      _
    // Predicated region
    $region22: #{tpu_custom_call.1} parent=1 // pred_check
      _
    $region23: #{tpu_custom_call.1} parent=1 // pred_check_branch
      %72 = sbr.rel (0) target = $region25
    $region24: #{tpu_custom_call.1} parent=1 // pred_region
      _
    $region25: #{tpu_custom_call.1} parent=1 // pred_fallthru
      _
    // Predicated region
    $region26: #{tpu_custom_call.1} parent=1 // pred_check
      _
    $region27: #{tpu_custom_call.1} parent=1 // pred_check_branch
      %74 = sbr.rel (0) target = $region29
    $region28: #{tpu_custom_call.1} parent=1 // pred_region
      %75 = dma.done [#allocation3], 128
    $region29: #{tpu_custom_call.1} parent=1 // pred_fallthru
      _
    // Predicated region
    $region30: #{tpu_custom_call.1} parent=1 // pred_check
      _
    $region31: #{tpu_custom_call.1} parent=1 // pred_check_branch
      %77 = sbr.rel (0) target = $region33
    $region32: #{tpu_custom_call.1} parent=1 // pred_region
      %78 = dma.done [#allocation6], 640
    $region33: #{tpu_custom_call.1} parent=1 // pred_fallthru
      _
    // Predicated region
    $region34: #{tpu_custom_call.1} parent=1 // pred_check
      _
    $region35: #{tpu_custom_call.1} parent=1 // pred_check_branch
      %80 = sbr.rel (0) target = $region37
    $region36: #{tpu_custom_call.1} parent=1 // pred_region
      %81 = dma.done [#allocation6], 12288
    $region37: #{tpu_custom_call.1} parent=1 // pred_fallthru
      _
    // Predicated region
    $region38: #{tpu_custom_call.1} parent=1 // pred_check
      _
    $region39: #{tpu_custom_call.1} parent=1 // pred_check_branch
      %83 = sbr.rel (0) target = $region41
    $region40: #{tpu_custom_call.1} parent=1 // pred_region
      %84 = dma.done [#allocation9], 128
    $region41: #{tpu_custom_call.1} parent=1 // pred_fallthru
      _
    // Predicated region
    $region42: #{tpu_custom_call.1} parent=1 // pred_check
      _
    $region43: #{tpu_custom_call.1} parent=1 // pred_check_branch
      %86 = sbr.rel (0) target = $region45
    $region44: #{tpu_custom_call.1} parent=1 // pred_region
      %87 = dma.done [#allocation9], 4096
    $region45: #{tpu_custom_call.1} parent=1 // pred_fallthru
      _
    %v89 = vld [vmem:[#allocation2] sm:$0xff]
    %v90 = vpack.c.bf16 %v89, %v89
    %v91 = vld [vmem:[#allocation5] sm:$0xff]
    %v92 = vld [vmem:[#allocation5 + $0x8] sm:$0xff]
    %v93 = vld [vmem:[#allocation5 + $0x10] sm:$0xff]
    %v94 = vld [vmem:[#allocation5 + $0x18] sm:$0xff]
    %v95 = vld [vmem:[#allocation5 + $0x20] sm:$0x11]
    %v96 = vld [vmem:[#allocation8] ss:$4 sm:$0x3]
    %v98 = vlaneseq
    %v99 = vshrl.u32 %v98, 7
    %v100 = vsub.s32 0, %v99
    %v101 = vrot.slane %v96, %v100
    %v102 = vlaneseq
    %v103 = vshrl.u32 %v102, 7
    %v104 = vsub.s32 1, %v103
    %v105 = vrot.slane %v96, %v104
    %v113 = vunpack.c.l.b16 %v91
    %v114 = vunpack.c.h.b16 %v91
    %v115 = vunpack.c.l.b16 %v92
    %v116 = vunpack.c.h.b16 %v92
    %v117 = vunpack.c.l.b16 %v93
    %v118 = vunpack.c.h.b16 %v93
    %v119 = vunpack.c.l.b16 %v94
    %v120 = vunpack.c.h.b16 %v94
    %v121 = vunpack.c.l.b16 %v95
    %v122 = vunpack.c.h.b16 %v95
    %v123 = vpack.c.b16 %v115, %v113
    %v124 = vpack.c.b16 %v116, %v114
    %v125 = vpack.c.b16 %v119, %v117
    %v126 = vpack.c.b16 %v120, %v118
    %v127 = vpack.c.b16 %v121, %v121
    %v128 = vpack.c.b16 %v122, %v122
    %vm133 = vcmask 277504
    %v135 = vsel %vm133, %v90, 0
    %vm137 = vcmask 1040384
    %v139 = vsel %vm137, %v127, 0
    %v142 = vsel %vm137, %v128, 0
    %144 = vmatprep.subr.bf16.mxu0 0
    %145 = vmatpush1.bf16.msra.mxu0 0
    %146 = vmatprep.subr.bf16.mxu0 0
    %147 = vmatpush1.bf16.msra.mxu0 0
    %148 = vmatprep.subr.bf16.mxu0 0
    %149 = vmatpush1.bf16.msra.mxu0 0
    %150 = vmatprep.subr.bf16.mxu0 0
    %151 = vmatpush1.bf16.msra.mxu0 0
    %152 = vmatprep.subr.bf16.mxu0 0
    %153 = vmatpush1.bf16.msra.mxu0 0
    %154 = vmatprep.subr.bf16.mxu0 %v142
    %155 = vmatpush1.bf16.msra.mxu0 %v139
    %156 = vmatprep.subr.bf16.mxu0 %v126
    %157 = vmatpush1.bf16.msra.mxu0 %v125
    %158 = vmatprep.subr.bf16.mxu0 %v124
    %159 = vmatpush1.bf16.msra.mxu0 %v123
    %160 = vmatprep.subr.bf16.mxu0 0
    %161 = vmatpush2.bf16.msra.mxu0 0
    %162 = vmatprep.subr.bf16.mxu0 0
    %163 = vmatpush2.bf16.msra.mxu0 0
    %164 = vmatprep.subr.bf16.mxu0 0
    %165 = vmatpush2.bf16.msra.mxu0 0
    %166 = vmatprep.subr.bf16.mxu0 0
    %167 = vmatpush2.bf16.msra.mxu0 0
    %168 = vmatprep.subr.bf16.mxu0 0
    %169 = vmatpush2.bf16.msra.mxu0 0
    %170 = vmatprep.subr.bf16.mxu0 0
    %171 = vmatpush2.bf16.msra.mxu0 0
    %172 = vmatprep.subr.bf16.mxu0 0
    %173 = vmatpush2.bf16.msra.mxu0 0
    %174 = vmatprep.subr.bf16.mxu0 0
    %175 = vmatpush2.bf16.msra.mxu0 0
    %176 = vmatprep.mubr.bf16.mxu0 0
    %177 = vmatmul.mubr.bf16.gmra.mxu0 %v135
    %v178 = vpop.f32.mrf.mxu0
    %v179 = vadd.f32 %v101, %v178
    %v180 = vpop.f32.mrf.mxu0
    %v181 = vadd.f32 %v105, %v180
    %v182 = vpop.f32.mrf.mxu0
    %v183 = vpop.f32.mrf.mxu0
    %184 = vdwg.mxu0
    %v185 = vmax.f32 %v179, 0.0
    %v186 = vmax.f32 %v181, 0.0
    %v187 = vpack.c.bf16 %v185, %v185
    %v188 = vpack.c.bf16 %v186, %v186
    %v189 = vld [vmem:[#allocation7] sm:$0xff]
    %v190 = vld [vmem:[#allocation7 + $0x8] sm:$0xff]
    %v191 = vld [vmem:[#allocation7 + $0x10] sm:$0xff]
    %v192 = vld [vmem:[#allocation7 + $0x18] sm:$0xff]
    %v193 = vld [vmem:[#allocation7 + $0x20] sm:$0xff]
    %v194 = vld [vmem:[#allocation7 + $0x28] sm:$0xff]
    %v195 = vld [vmem:[#allocation7 + $0x30] sm:$0xff]
    %v196 = vld [vmem:[#allocation7 + $0x38] sm:$0xff]
    %v197 = vld [vmem:[#allocation7 + $0x40] sm:$0xff]
    %v198 = vld [vmem:[#allocation7 + $0x48] sm:$0xff]
    %v199 = vld [vmem:[#allocation7 + $0x50] sm:$0xff]
    %v200 = vld [vmem:[#allocation7 + $0x58] sm:$0xff]
    %v201 = vld [vmem:[#allocation7 + $0x60] sm:$0xff]
    %v202 = vld [vmem:[#allocation7 + $0x68] sm:$0xff]
    %v203 = vld [vmem:[#allocation7 + $0x70] sm:$0xff]
    %v204 = vld [vmem:[#allocation7 + $0x78] sm:$0xff]
    %v205 = vld [vmem:[#allocation7 + $0x80] sm:$0xff]
    %v206 = vld [vmem:[#allocation7 + $0x88] sm:$0xff]
    %v207 = vld [vmem:[#allocation7 + $0x90] sm:$0xff]
    %v208 = vld [vmem:[#allocation7 + $0x98] sm:$0xff]
    %v209 = vld [vmem:[#allocation7 + $0xa0] sm:$0xff]
    %v210 = vld [vmem:[#allocation7 + $0xa8] sm:$0xff]
    %v211 = vld [vmem:[#allocation7 + $0xb0] sm:$0xff]
    %v212 = vld [vmem:[#allocation7 + $0xb8] sm:$0xff]
    %v213 = vld [vmem:[#allocation7 + $0xc0] sm:$0xff]
    %v214 = vld [vmem:[#allocation7 + $0xc8] sm:$0xff]
    %v215 = vld [vmem:[#allocation7 + $0xd0] sm:$0xff]
    %v216 = vld [vmem:[#allocation7 + $0xd8] sm:$0xff]
    %v217 = vld [vmem:[#allocation7 + $0xe0] sm:$0xff]
    %v218 = vld [vmem:[#allocation7 + $0xe8] sm:$0xff]
    %v219 = vld [vmem:[#allocation7 + $0xf0] sm:$0xff]
    %v220 = vld [vmem:[#allocation7 + $0xf8] sm:$0xff]
    %s221 = scalar_lea.vmem [#allocation8], 1
    %v222 = vld [vmem:[%s221] ss:$4 sm:$0x3]
    %v224 = vlaneseq
    %v225 = vshrl.u32 %v224, 7
    %v226 = vsub.s32 0, %v225
    %v227 = vrot.slane %v222, %v226
    %v228 = vlaneseq
    %v229 = vshrl.u32 %v228, 7
    %v230 = vsub.s32 1, %v229
    %v231 = vrot.slane %v222, %v230
    %v266 = vunpack.c.l.b16 %v189
    %v267 = vunpack.c.h.b16 %v189
    %v268 = vunpack.c.l.b16 %v190
    %v269 = vunpack.c.h.b16 %v190
    %v270 = vunpack.c.l.b16 %v191
    %v271 = vunpack.c.h.b16 %v191
    %v272 = vunpack.c.l.b16 %v192
    %v273 = vunpack.c.h.b16 %v192
    %v274 = vunpack.c.l.b16 %v193
    %v275 = vunpack.c.h.b16 %v193
    %v276 = vunpack.c.l.b16 %v194
    %v277 = vunpack.c.h.b16 %v194
    %v278 = vunpack.c.l.b16 %v195
    %v279 = vunpack.c.h.b16 %v195
    %v280 = vunpack.c.l.b16 %v196
    %v281 = vunpack.c.h.b16 %v196
    %v282 = vunpack.c.l.b16 %v197
    %v283 = vunpack.c.h.b16 %v197
    %v284 = vunpack.c.l.b16 %v198
    %v285 = vunpack.c.h.b16 %v198
    %v286 = vunpack.c.l.b16 %v199
    %v287 = vunpack.c.h.b16 %v199
    %v288 = vunpack.c.l.b16 %v200
    %v289 = vunpack.c.h.b16 %v200
    %v290 = vunpack.c.l.b16 %v201
    %v291 = vunpack.c.h.b16 %v201
    %v292 = vunpack.c.l.b16 %v202
    %v293 = vunpack.c.h.b16 %v202
    %v294 = vunpack.c.l.b16 %v203
    %v295 = vunpack.c.h.b16 %v203
    %v296 = vunpack.c.l.b16 %v204
    %v297 = vunpack.c.h.b16 %v204
    %v298 = vunpack.c.l.b16 %v205
    %v299 = vunpack.c.h.b16 %v205
    %v300 = vunpack.c.l.b16 %v206
    %v301 = vunpack.c.h.b16 %v206
    %v302 = vunpack.c.l.b16 %v207
    %v303 = vunpack.c.h.b16 %v207
    %v304 = vunpack.c.l.b16 %v208
    %v305 = vunpack.c.h.b16 %v208
    %v306 = vunpack.c.l.b16 %v209
    %v307 = vunpack.c.h.b16 %v209
    %v308 = vunpack.c.l.b16 %v210
    %v309 = vunpack.c.h.b16 %v210
    %v310 = vunpack.c.l.b16 %v211
    %v311 = vunpack.c.h.b16 %v211
    %v312 = vunpack.c.l.b16 %v212
    %v313 = vunpack.c.h.b16 %v212
    %v314 = vunpack.c.l.b16 %v213
    %v315 = vunpack.c.h.b16 %v213
    %v316 = vunpack.c.l.b16 %v214
    %v317 = vunpack.c.h.b16 %v214
    %v318 = vunpack.c.l.b16 %v215
    %v319 = vunpack.c.h.b16 %v215
    %v320 = vunpack.c.l.b16 %v216
    %v321 = vunpack.c.h.b16 %v216
    %v322 = vunpack.c.l.b16 %v217
    %v323 = vunpack.c.h.b16 %v217
    %v324 = vunpack.c.l.b16 %v218
    %v325 = vunpack.c.h.b16 %v218
    %v326 = vunpack.c.l.b16 %v219
    %v327 = vunpack.c.h.b16 %v219
    %v328 = vunpack.c.l.b16 %v220
    %v329 = vunpack.c.h.b16 %v220
    %v330 = vpack.c.b16 %v268, %v266
    %v331 = vpack.c.b16 %v269, %v267
    %v332 = vpack.c.b16 %v272, %v270
    %v333 = vpack.c.b16 %v273, %v271
    %v334 = vpack.c.b16 %v276, %v274
    %v335 = vpack.c.b16 %v277, %v275
    %v336 = vpack.c.b16 %v280, %v278
    %v337 = vpack.c.b16 %v281, %v279
    %v338 = vpack.c.b16 %v284, %v282
    %v339 = vpack.c.b16 %v285, %v283
    %v340 = vpack.c.b16 %v288, %v286
    %v341 = vpack.c.b16 %v289, %v287
    %v342 = vpack.c.b16 %v292, %v290
    %v343 = vpack.c.b16 %v293, %v291
    %v344 = vpack.c.b16 %v296, %v294
    %v345 = vpack.c.b16 %v297, %v295
    %v346 = vpack.c.b16 %v300, %v298
    %v347 = vpack.c.b16 %v301, %v299
    %v348 = vpack.c.b16 %v304, %v302
    %v349 = vpack.c.b16 %v305, %v303
    %v350 = vpack.c.b16 %v308, %v306
    %v351 = vpack.c.b16 %v309, %v307
    %v352 = vpack.c.b16 %v312, %v310
    %v353 = vpack.c.b16 %v313, %v311
    %v354 = vpack.c.b16 %v316, %v314
    %v355 = vpack.c.b16 %v317, %v315
    %v356 = vpack.c.b16 %v320, %v318
    %v357 = vpack.c.b16 %v321, %v319
    %v358 = vpack.c.b16 %v324, %v322
    %v359 = vpack.c.b16 %v325, %v323
    %v360 = vpack.c.b16 %v328, %v326
    %v361 = vpack.c.b16 %v329, %v327
    %394 = vmatprep.subr.bf16.mxu0 %v345
    %395 = vmatpush1.bf16.msra.mxu0 %v344
    %396 = vmatprep.subr.bf16.mxu0 %v343
    %397 = vmatpush1.bf16.msra.mxu0 %v342
    %398 = vmatprep.subr.bf16.mxu0 %v341
    %399 = vmatpush1.bf16.msra.mxu0 %v340
    %400 = vmatprep.subr.bf16.mxu0 %v339
    %401 = vmatpush1.bf16.msra.mxu0 %v338
    %402 = vmatprep.subr.bf16.mxu0 %v337
    %403 = vmatpush1.bf16.msra.mxu0 %v336
    %404 = vmatprep.subr.bf16.mxu0 %v335
    %405 = vmatpush1.bf16.msra.mxu0 %v334
    %406 = vmatprep.subr.bf16.mxu0 %v333
    %407 = vmatpush1.bf16.msra.mxu0 %v332
    %408 = vmatprep.subr.bf16.mxu0 %v331
    %409 = vmatpush1.bf16.msra.mxu0 %v330
    %410 = vmatprep.subr.bf16.mxu0 %v361
    %411 = vmatpush2.bf16.msra.mxu0 %v360
    %412 = vmatprep.subr.bf16.mxu0 %v359
    %413 = vmatpush2.bf16.msra.mxu0 %v358
    %414 = vmatprep.subr.bf16.mxu0 %v357
    %415 = vmatpush2.bf16.msra.mxu0 %v356
    %416 = vmatprep.subr.bf16.mxu0 %v355
    %417 = vmatpush2.bf16.msra.mxu0 %v354
    %418 = vmatprep.subr.bf16.mxu0 %v353
    %419 = vmatpush2.bf16.msra.mxu0 %v352
    %420 = vmatprep.subr.bf16.mxu0 %v351
    %421 = vmatpush2.bf16.msra.mxu0 %v350
    %422 = vmatprep.subr.bf16.mxu0 %v349
    %423 = vmatpush2.bf16.msra.mxu0 %v348
    %424 = vmatprep.subr.bf16.mxu0 %v347
    %425 = vmatpush2.bf16.msra.mxu0 %v346
    %426 = vmatprep.mubr.bf16.mxu0 %v188
    %427 = vmatmul.mubr.bf16.gmra.mxu0 %v187
    %v428 = vpop.f32.mrf.mxu0
    %v429 = vadd.f32 %v227, %v428
    %v430 = vpop.f32.mrf.mxu0
    %v431 = vadd.f32 %v231, %v430
    %v432 = vpop.f32.mrf.mxu0
    %v433 = vpop.f32.mrf.mxu0
    %434 = vdwg.mxu0
    %v435 = vmax.f32 %v429, 0.0
    %v436 = vmax.f32 %v431, 0.0
    %v437 = vpack.c.bf16 %v435, %v435
    %v438 = vpack.c.bf16 %v436, %v436
    %s439 = scalar_lea.vmem [#allocation7], 256
    %v440 = vld [vmem:[%s439] sm:$0xff]
    %v441 = vld [vmem:[%s439 + $0x8] sm:$0xff]
    %v442 = vld [vmem:[%s439 + $0x10] sm:$0xff]
    %v443 = vld [vmem:[%s439 + $0x18] sm:$0xff]
    %v444 = vld [vmem:[%s439 + $0x20] sm:$0xff]
    %v445 = vld [vmem:[%s439 + $0x28] sm:$0xff]
    %v446 = vld [vmem:[%s439 + $0x30] sm:$0xff]
    %v447 = vld [vmem:[%s439 + $0x38] sm:$0xff]
    %v448 = vld [vmem:[%s439 + $0x40] sm:$0xff]
    %v449 = vld [vmem:[%s439 + $0x48] sm:$0xff]
    %v450 = vld [vmem:[%s439 + $0x50] sm:$0xff]
    %v451 = vld [vmem:[%s439 + $0x58] sm:$0xff]
    %v452 = vld [vmem:[%s439 + $0x60] sm:$0xff]
    %v453 = vld [vmem:[%s439 + $0x68] sm:$0xff]
    %v454 = vld [vmem:[%s439 + $0x70] sm:$0xff]
    %v455 = vld [vmem:[%s439 + $0x78] sm:$0xff]
    %v456 = vld [vmem:[%s439 + $0x80] sm:$0xff]
    %v457 = vld [vmem:[%s439 + $0x88] sm:$0xff]
    %v458 = vld [vmem:[%s439 + $0x90] sm:$0xff]
    %v459 = vld [vmem:[%s439 + $0x98] sm:$0xff]
    %v460 = vld [vmem:[%s439 + $0xa0] sm:$0xff]
    %v461 = vld [vmem:[%s439 + $0xa8] sm:$0xff]
    %v462 = vld [vmem:[%s439 + $0xb0] sm:$0xff]
    %v463 = vld [vmem:[%s439 + $0xb8] sm:$0xff]
    %v464 = vld [vmem:[%s439 + $0xc0] sm:$0xff]
    %v465 = vld [vmem:[%s439 + $0xc8] sm:$0xff]
    %v466 = vld [vmem:[%s439 + $0xd0] sm:$0xff]
    %v467 = vld [vmem:[%s439 + $0xd8] sm:$0xff]
    %v468 = vld [vmem:[%s439 + $0xe0] sm:$0xff]
    %v469 = vld [vmem:[%s439 + $0xe8] sm:$0xff]
    %v470 = vld [vmem:[%s439 + $0xf0] sm:$0xff]
    %v471 = vld [vmem:[%s439 + $0xf8] sm:$0xff]
    %s472 = scalar_lea.vmem [#allocation8], 2
    %v473 = vld [vmem:[%s472] ss:$4 sm:$0x3]
    %v475 = vlaneseq
    %v476 = vshrl.u32 %v475, 7
    %v477 = vsub.s32 0, %v476
    %v478 = vrot.slane %v473, %v477
    %v479 = vlaneseq
    %v480 = vshrl.u32 %v479, 7
    %v481 = vsub.s32 1, %v480
    %v482 = vrot.slane %v473, %v481
    %v517 = vunpack.c.l.b16 %v440
    %v518 = vunpack.c.h.b16 %v440
    %v519 = vunpack.c.l.b16 %v441
    %v520 = vunpack.c.h.b16 %v441
    %v521 = vunpack.c.l.b16 %v442
    %v522 = vunpack.c.h.b16 %v442
    %v523 = vunpack.c.l.b16 %v443
    %v524 = vunpack.c.h.b16 %v443
    %v525 = vunpack.c.l.b16 %v444
    %v526 = vunpack.c.h.b16 %v444
    %v527 = vunpack.c.l.b16 %v445
    %v528 = vunpack.c.h.b16 %v445
    %v529 = vunpack.c.l.b16 %v446
    %v530 = vunpack.c.h.b16 %v446
    %v531 = vunpack.c.l.b16 %v447
    %v532 = vunpack.c.h.b16 %v447
    %v533 = vunpack.c.l.b16 %v448
    %v534 = vunpack.c.h.b16 %v448
    %v535 = vunpack.c.l.b16 %v449
    %v536 = vunpack.c.h.b16 %v449
    %v537 = vunpack.c.l.b16 %v450
    %v538 = vunpack.c.h.b16 %v450
    %v539 = vunpack.c.l.b16 %v451
    %v540 = vunpack.c.h.b16 %v451
    %v541 = vunpack.c.l.b16 %v452
    %v542 = vunpack.c.h.b16 %v452
    %v543 = vunpack.c.l.b16 %v453
    %v544 = vunpack.c.h.b16 %v453
    %v545 = vunpack.c.l.b16 %v454
    %v546 = vunpack.c.h.b16 %v454
    %v547 = vunpack.c.l.b16 %v455
    %v548 = vunpack.c.h.b16 %v455
    %v549 = vunpack.c.l.b16 %v456
    %v550 = vunpack.c.h.b16 %v456
    %v551 = vunpack.c.l.b16 %v457
    %v552 = vunpack.c.h.b16 %v457
    %v553 = vunpack.c.l.b16 %v458
    %v554 = vunpack.c.h.b16 %v458
    %v555 = vunpack.c.l.b16 %v459
    %v556 = vunpack.c.h.b16 %v459
    %v557 = vunpack.c.l.b16 %v460
    %v558 = vunpack.c.h.b16 %v460
    %v559 = vunpack.c.l.b16 %v461
    %v560 = vunpack.c.h.b16 %v461
    %v561 = vunpack.c.l.b16 %v462
    %v562 = vunpack.c.h.b16 %v462
    %v563 = vunpack.c.l.b16 %v463
    %v564 = vunpack.c.h.b16 %v463
    %v565 = vunpack.c.l.b16 %v464
    %v566 = vunpack.c.h.b16 %v464
    %v567 = vunpack.c.l.b16 %v465
    %v568 = vunpack.c.h.b16 %v465
    %v569 = vunpack.c.l.b16 %v466
    %v570 = vunpack.c.h.b16 %v466
    %v571 = vunpack.c.l.b16 %v467
    %v572 = vunpack.c.h.b16 %v467
    %v573 = vunpack.c.l.b16 %v468
    %v574 = vunpack.c.h.b16 %v468
    %v575 = vunpack.c.l.b16 %v469
    %v576 = vunpack.c.h.b16 %v469
    %v577 = vunpack.c.l.b16 %v470
    %v578 = vunpack.c.h.b16 %v470
    %v579 = vunpack.c.l.b16 %v471
    %v580 = vunpack.c.h.b16 %v471
    %v581 = vpack.c.b16 %v519, %v517
    %v582 = vpack.c.b16 %v520, %v518
    %v583 = vpack.c.b16 %v523, %v521
    %v584 = vpack.c.b16 %v524, %v522
    %v585 = vpack.c.b16 %v527, %v525
    %v586 = vpack.c.b16 %v528, %v526
    %v587 = vpack.c.b16 %v531, %v529
    %v588 = vpack.c.b16 %v532, %v530
    %v589 = vpack.c.b16 %v535, %v533
    %v590 = vpack.c.b16 %v536, %v534
    %v591 = vpack.c.b16 %v539, %v537
    %v592 = vpack.c.b16 %v540, %v538
    %v593 = vpack.c.b16 %v543, %v541
    %v594 = vpack.c.b16 %v544, %v542
    %v595 = vpack.c.b16 %v547, %v545
    %v596 = vpack.c.b16 %v548, %v546
    %v597 = vpack.c.b16 %v551, %v549
    %v598 = vpack.c.b16 %v552, %v550
    %v599 = vpack.c.b16 %v555, %v553
    %v600 = vpack.c.b16 %v556, %v554
    %v601 = vpack.c.b16 %v559, %v557
    %v602 = vpack.c.b16 %v560, %v558
    %v603 = vpack.c.b16 %v563, %v561
    %v604 = vpack.c.b16 %v564, %v562
    %v605 = vpack.c.b16 %v567, %v565
    %v606 = vpack.c.b16 %v568, %v566
    %v607 = vpack.c.b16 %v571, %v569
    %v608 = vpack.c.b16 %v572, %v570
    %v609 = vpack.c.b16 %v575, %v573
    %v610 = vpack.c.b16 %v576, %v574
    %v611 = vpack.c.b16 %v579, %v577
    %v612 = vpack.c.b16 %v580, %v578
    %645 = vmatprep.subr.bf16.mxu0 %v596
    %646 = vmatpush1.bf16.msra.mxu0 %v595
    %647 = vmatprep.subr.bf16.mxu0 %v594
    %648 = vmatpush1.bf16.msra.mxu0 %v593
    %649 = vmatprep.subr.bf16.mxu0 %v592
    %650 = vmatpush1.bf16.msra.mxu0 %v591
    %651 = vmatprep.subr.bf16.mxu0 %v590
    %652 = vmatpush1.bf16.msra.mxu0 %v589
    %653 = vmatprep.subr.bf16.mxu0 %v588
    %654 = vmatpush1.bf16.msra.mxu0 %v587
    %655 = vmatprep.subr.bf16.mxu0 %v586
    %656 = vmatpush1.bf16.msra.mxu0 %v585
    %657 = vmatprep.subr.bf16.mxu0 %v584
    %658 = vmatpush1.bf16.msra.mxu0 %v583
    %659 = vmatprep.subr.bf16.mxu0 %v582
    %660 = vmatpush1.bf16.msra.mxu0 %v581
    %661 = vmatprep.subr.bf16.mxu0 %v612
    %662 = vmatpush2.bf16.msra.mxu0 %v611
    %663 = vmatprep.subr.bf16.mxu0 %v610
    %664 = vmatpush2.bf16.msra.mxu0 %v609
    %665 = vmatprep.subr.bf16.mxu0 %v608
    %666 = vmatpush2.bf16.msra.mxu0 %v607
    %667 = vmatprep.subr.bf16.mxu0 %v606
    %668 = vmatpush2.bf16.msra.mxu0 %v605
    %669 = vmatprep.subr.bf16.mxu0 %v604
    %670 = vmatpush2.bf16.msra.mxu0 %v603
    %671 = vmatprep.subr.bf16.mxu0 %v602
    %672 = vmatpush2.bf16.msra.mxu0 %v601
    %673 = vmatprep.subr.bf16.mxu0 %v600
    %674 = vmatpush2.bf16.msra.mxu0 %v599
    %675 = vmatprep.subr.bf16.mxu0 %v598
    %676 = vmatpush2.bf16.msra.mxu0 %v597
    %677 = vmatprep.mubr.bf16.mxu0 %v438
    %678 = vmatmul.mubr.bf16.gmra.mxu0 %v437
    %v679 = vpop.f32.mrf.mxu0
    %v680 = vadd.f32 %v478, %v679
    %v681 = vpop.f32.mrf.mxu0
    %v682 = vadd.f32 %v482, %v681
    %v683 = vpop.f32.mrf.mxu0
    %v684 = vpop.f32.mrf.mxu0
    %685 = vdwg.mxu0
    %v686 = vmax.f32 %v680, 0.0
    %v687 = vmax.f32 %v682, 0.0
    %v688 = vadd.f32 %v185, %v686
    %v689 = vadd.f32 %v186, %v687
    %v690 = vpack.c.bf16 %v688, %v688
    %v691 = vpack.c.bf16 %v689, %v689
    %s692 = scalar_lea.vmem [#allocation7], 512
    %v693 = vld [vmem:[%s692] sm:$0xff]
    %v694 = vld [vmem:[%s692 + $0x8] sm:$0xff]
    %v695 = vld [vmem:[%s692 + $0x10] sm:$0xff]
    %v696 = vld [vmem:[%s692 + $0x18] sm:$0xff]
    %v697 = vld [vmem:[%s692 + $0x20] sm:$0xff]
    %v698 = vld [vmem:[%s692 + $0x28] sm:$0xff]
    %v699 = vld [vmem:[%s692 + $0x30] sm:$0xff]
    %v700 = vld [vmem:[%s692 + $0x38] sm:$0xff]
    %v701 = vld [vmem:[%s692 + $0x40] sm:$0xff]
    %v702 = vld [vmem:[%s692 + $0x48] sm:$0xff]
    %v703 = vld [vmem:[%s692 + $0x50] sm:$0xff]
    %v704 = vld [vmem:[%s692 + $0x58] sm:$0xff]
    %v705 = vld [vmem:[%s692 + $0x60] sm:$0xff]
    %v706 = vld [vmem:[%s692 + $0x68] sm:$0xff]
    %v707 = vld [vmem:[%s692 + $0x70] sm:$0xff]
    %v708 = vld [vmem:[%s692 + $0x78] sm:$0xff]
    %v709 = vld [vmem:[%s692 + $0x80] sm:$0xff]
    %v710 = vld [vmem:[%s692 + $0x88] sm:$0xff]
    %v711 = vld [vmem:[%s692 + $0x90] sm:$0xff]
    %v712 = vld [vmem:[%s692 + $0x98] sm:$0xff]
    %v713 = vld [vmem:[%s692 + $0xa0] sm:$0xff]
    %v714 = vld [vmem:[%s692 + $0xa8] sm:$0xff]
    %v715 = vld [vmem:[%s692 + $0xb0] sm:$0xff]
    %v716 = vld [vmem:[%s692 + $0xb8] sm:$0xff]
    %v717 = vld [vmem:[%s692 + $0xc0] sm:$0xff]
    %v718 = vld [vmem:[%s692 + $0xc8] sm:$0xff]
    %v719 = vld [vmem:[%s692 + $0xd0] sm:$0xff]
    %v720 = vld [vmem:[%s692 + $0xd8] sm:$0xff]
    %v721 = vld [vmem:[%s692 + $0xe0] sm:$0xff]
    %v722 = vld [vmem:[%s692 + $0xe8] sm:$0xff]
    %v723 = vld [vmem:[%s692 + $0xf0] sm:$0xff]
    %v724 = vld [vmem:[%s692 + $0xf8] sm:$0xff]
    %s725 = scalar_lea.vmem [#allocation8], 3
    %v726 = vld [vmem:[%s725] ss:$4 sm:$0x3]
    %v728 = vlaneseq
    %v729 = vshrl.u32 %v728, 7
    %v730 = vsub.s32 0, %v729
    %v731 = vrot.slane %v726, %v730
    %v732 = vlaneseq
    %v733 = vshrl.u32 %v732, 7
    %v734 = vsub.s32 1, %v733
    %v735 = vrot.slane %v726, %v734
    %v770 = vunpack.c.l.b16 %v693
    %v771 = vunpack.c.h.b16 %v693
    %v772 = vunpack.c.l.b16 %v694
    %v773 = vunpack.c.h.b16 %v694
    %v774 = vunpack.c.l.b16 %v695
    %v775 = vunpack.c.h.b16 %v695
    %v776 = vunpack.c.l.b16 %v696
    %v777 = vunpack.c.h.b16 %v696
    %v778 = vunpack.c.l.b16 %v697
    %v779 = vunpack.c.h.b16 %v697
    %v780 = vunpack.c.l.b16 %v698
    %v781 = vunpack.c.h.b16 %v698
    %v782 = vunpack.c.l.b16 %v699
    %v783 = vunpack.c.h.b16 %v699
    %v784 = vunpack.c.l.b16 %v700
    %v785 = vunpack.c.h.b16 %v700
    %v786 = vunpack.c.l.b16 %v701
    %v787 = vunpack.c.h.b16 %v701
    %v788 = vunpack.c.l.b16 %v702
    %v789 = vunpack.c.h.b16 %v702
    %v790 = vunpack.c.l.b16 %v703
    %v791 = vunpack.c.h.b16 %v703
    %v792 = vunpack.c.l.b16 %v704
    %v793 = vunpack.c.h.b16 %v704
    %v794 = vunpack.c.l.b16 %v705
    %v795 = vunpack.c.h.b16 %v705
    %v796 = vunpack.c.l.b16 %v706
    %v797 = vunpack.c.h.b16 %v706
    %v798 = vunpack.c.l.b16 %v707
    %v799 = vunpack.c.h.b16 %v707
    %v800 = vunpack.c.l.b16 %v708
    %v801 = vunpack.c.h.b16 %v708
    %v802 = vunpack.c.l.b16 %v709
    %v803 = vunpack.c.h.b16 %v709
    %v804 = vunpack.c.l.b16 %v710
    %v805 = vunpack.c.h.b16 %v710
    %v806 = vunpack.c.l.b16 %v711
    %v807 = vunpack.c.h.b16 %v711
    %v808 = vunpack.c.l.b16 %v712
    %v809 = vunpack.c.h.b16 %v712
    %v810 = vunpack.c.l.b16 %v713
    %v811 = vunpack.c.h.b16 %v713
    %v812 = vunpack.c.l.b16 %v714
    %v813 = vunpack.c.h.b16 %v714
    %v814 = vunpack.c.l.b16 %v715
    %v815 = vunpack.c.h.b16 %v715
    %v816 = vunpack.c.l.b16 %v716
    %v817 = vunpack.c.h.b16 %v716
    %v818 = vunpack.c.l.b16 %v717
    %v819 = vunpack.c.h.b16 %v717
    %v820 = vunpack.c.l.b16 %v718
    %v821 = vunpack.c.h.b16 %v718
    %v822 = vunpack.c.l.b16 %v719
    %v823 = vunpack.c.h.b16 %v719
    %v824 = vunpack.c.l.b16 %v720
    %v825 = vunpack.c.h.b16 %v720
    %v826 = vunpack.c.l.b16 %v721
    %v827 = vunpack.c.h.b16 %v721
    %v828 = vunpack.c.l.b16 %v722
    %v829 = vunpack.c.h.b16 %v722
    %v830 = vunpack.c.l.b16 %v723
    %v831 = vunpack.c.h.b16 %v723
    %v832 = vunpack.c.l.b16 %v724
    %v833 = vunpack.c.h.b16 %v724
    %v834 = vpack.c.b16 %v772, %v770
    %v835 = vpack.c.b16 %v773, %v771
    %v836 = vpack.c.b16 %v776, %v774
    %v837 = vpack.c.b16 %v777, %v775
    %v838 = vpack.c.b16 %v780, %v778
    %v839 = vpack.c.b16 %v781, %v779
    %v840 = vpack.c.b16 %v784, %v782
    %v841 = vpack.c.b16 %v785, %v783
    %v842 = vpack.c.b16 %v788, %v786
    %v843 = vpack.c.b16 %v789, %v787
    %v844 = vpack.c.b16 %v792, %v790
    %v845 = vpack.c.b16 %v793, %v791
    %v846 = vpack.c.b16 %v796, %v794
    %v847 = vpack.c.b16 %v797, %v795
    %v848 = vpack.c.b16 %v800, %v798
    %v849 = vpack.c.b16 %v801, %v799
    %v850 = vpack.c.b16 %v804, %v802
    %v851 = vpack.c.b16 %v805, %v803
    %v852 = vpack.c.b16 %v808, %v806
    %v853 = vpack.c.b16 %v809, %v807
    %v854 = vpack.c.b16 %v812, %v810
    %v855 = vpack.c.b16 %v813, %v811
    %v856 = vpack.c.b16 %v816, %v814
    %v857 = vpack.c.b16 %v817, %v815
    %v858 = vpack.c.b16 %v820, %v818
    %v859 = vpack.c.b16 %v821, %v819
    %v860 = vpack.c.b16 %v824, %v822
    %v861 = vpack.c.b16 %v825, %v823
    %v862 = vpack.c.b16 %v828, %v826
    %v863 = vpack.c.b16 %v829, %v827
    %v864 = vpack.c.b16 %v832, %v830
    %v865 = vpack.c.b16 %v833, %v831
    %898 = vmatprep.subr.bf16.mxu0 %v849
    %899 = vmatpush1.bf16.msra.mxu0 %v848
    %900 = vmatprep.subr.bf16.mxu0 %v847
    %901 = vmatpush1.bf16.msra.mxu0 %v846
    %902 = vmatprep.subr.bf16.mxu0 %v845
    %903 = vmatpush1.bf16.msra.mxu0 %v844
    %904 = vmatprep.subr.bf16.mxu0 %v843
    %905 = vmatpush1.bf16.msra.mxu0 %v842
    %906 = vmatprep.subr.bf16.mxu0 %v841
    %907 = vmatpush1.bf16.msra.mxu0 %v840
    %908 = vmatprep.subr.bf16.mxu0 %v839
    %909 = vmatpush1.bf16.msra.mxu0 %v838
    %910 = vmatprep.subr.bf16.mxu0 %v837
    %911 = vmatpush1.bf16.msra.mxu0 %v836
    %912 = vmatprep.subr.bf16.mxu0 %v835
    %913 = vmatpush1.bf16.msra.mxu0 %v834
    %914 = vmatprep.subr.bf16.mxu0 %v865
    %915 = vmatpush2.bf16.msra.mxu0 %v864
    %916 = vmatprep.subr.bf16.mxu0 %v863
    %917 = vmatpush2.bf16.msra.mxu0 %v862
    %918 = vmatprep.subr.bf16.mxu0 %v861
    %919 = vmatpush2.bf16.msra.mxu0 %v860
    %920 = vmatprep.subr.bf16.mxu0 %v859
    %921 = vmatpush2.bf16.msra.mxu0 %v858
    %922 = vmatprep.subr.bf16.mxu0 %v857
    %923 = vmatpush2.bf16.msra.mxu0 %v856
    %924 = vmatprep.subr.bf16.mxu0 %v855
    %925 = vmatpush2.bf16.msra.mxu0 %v854
    %926 = vmatprep.subr.bf16.mxu0 %v853
    %927 = vmatpush2.bf16.msra.mxu0 %v852
    %928 = vmatprep.subr.bf16.mxu0 %v851
    %929 = vmatpush2.bf16.msra.mxu0 %v850
    %930 = vmatprep.mubr.bf16.mxu0 %v691
    %931 = vmatmul.mubr.bf16.gmra.mxu0 %v690
    %v932 = vpop.f32.mrf.mxu0
    %v933 = vadd.f32 %v731, %v932
    %v934 = vpop.f32.mrf.mxu0
    %v935 = vadd.f32 %v735, %v934
    %v936 = vpop.f32.mrf.mxu0
    %v937 = vpop.f32.mrf.mxu0
    %938 = vdwg.mxu0
    %v939 = vmax.f32 %v933, 0.0
    %v940 = vmax.f32 %v935, 0.0
    %v941 = vpack.c.bf16 %v939, %v939
    %v942 = vpack.c.bf16 %v940, %v940
    %v943 = vld [vmem:[#allocation10] sm:$0xf]
    %v944 = vld [vmem:[#allocation10 + $0x4] sm:$0xf]
    %v945 = vld [vmem:[#allocation10 + $0x8] sm:$0xf]
    %v946 = vld [vmem:[#allocation10 + $0xc] sm:$0xf]
    %v947 = vld [vmem:[#allocation10 + $0x10] sm:$0xf]
    %v948 = vld [vmem:[#allocation10 + $0x14] sm:$0xf]
    %v949 = vld [vmem:[#allocation10 + $0x18] sm:$0xf]
    %v950 = vld [vmem:[#allocation10 + $0x1c] sm:$0xf]
    %v951 = vld [vmem:[#allocation10 + $0x20] sm:$0xf]
    %v952 = vld [vmem:[#allocation10 + $0x24] sm:$0xf]
    %v953 = vld [vmem:[#allocation10 + $0x28] sm:$0xf]
    %v954 = vld [vmem:[#allocation10 + $0x2c] sm:$0xf]
    %v955 = vld [vmem:[#allocation10 + $0x30] sm:$0xf]
    %v956 = vld [vmem:[#allocation10 + $0x34] sm:$0xf]
    %v957 = vld [vmem:[#allocation10 + $0x38] sm:$0xf]
    %v958 = vld [vmem:[#allocation10 + $0x3c] sm:$0xf]
    %v959 = vld [vmem:[#allocation10 + $0x40] sm:$0xf]
    %v960 = vld [vmem:[#allocation10 + $0x44] sm:$0xf]
    %v961 = vld [vmem:[#allocation10 + $0x48] sm:$0xf]
    %v962 = vld [vmem:[#allocation10 + $0x4c] sm:$0xf]
    %v963 = vld [vmem:[#allocation10 + $0x50] sm:$0xf]
    %v964 = vld [vmem:[#allocation10 + $0x54] sm:$0xf]
    %v965 = vld [vmem:[#allocation10 + $0x58] sm:$0xf]
    %v966 = vld [vmem:[#allocation10 + $0x5c] sm:$0xf]
    %v967 = vld [vmem:[#allocation10 + $0x60] sm:$0xf]
    %v968 = vld [vmem:[#allocation10 + $0x64] sm:$0xf]
    %v969 = vld [vmem:[#allocation10 + $0x68] sm:$0xf]
    %v970 = vld [vmem:[#allocation10 + $0x6c] sm:$0xf]
    %v971 = vld [vmem:[#allocation10 + $0x70] sm:$0xf]
    %v972 = vld [vmem:[#allocation10 + $0x74] sm:$0xf]
    %v973 = vld [vmem:[#allocation10 + $0x78] sm:$0xf]
    %v974 = vld [vmem:[#allocation10 + $0x7c] sm:$0xf]
    %s975 = scalar_lea.vmem [#allocation10], 128
    %v976 = vld [vmem:[%s975] sm:$0xf]
    %v977 = vld [vmem:[%s975 + $0x4] sm:$0xf]
    %v978 = vld [vmem:[%s975 + $0x8] sm:$0xf]
    %v979 = vld [vmem:[%s975 + $0xc] sm:$0xf]
    %v980 = vld [vmem:[%s975 + $0x10] sm:$0xf]
    %v981 = vld [vmem:[%s975 + $0x14] sm:$0xf]
    %v982 = vld [vmem:[%s975 + $0x18] sm:$0xf]
    %v983 = vld [vmem:[%s975 + $0x1c] sm:$0xf]
    %v984 = vld [vmem:[%s975 + $0x20] sm:$0xf]
    %v985 = vld [vmem:[%s975 + $0x24] sm:$0xf]
    %v986 = vld [vmem:[%s975 + $0x28] sm:$0xf]
    %v987 = vld [vmem:[%s975 + $0x2c] sm:$0xf]
    %v988 = vld [vmem:[%s975 + $0x30] sm:$0xf]
    %v989 = vld [vmem:[%s975 + $0x34] sm:$0xf]
    %v990 = vld [vmem:[%s975 + $0x38] sm:$0xf]
    %v991 = vld [vmem:[%s975 + $0x3c] sm:$0xf]
    %v992 = vld [vmem:[%s975 + $0x40] sm:$0xf]
    %v993 = vld [vmem:[%s975 + $0x44] sm:$0xf]
    %v994 = vld [vmem:[%s975 + $0x48] sm:$0xf]
    %v995 = vld [vmem:[%s975 + $0x4c] sm:$0xf]
    %v996 = vld [vmem:[%s975 + $0x50] sm:$0xf]
    %v997 = vld [vmem:[%s975 + $0x54] sm:$0xf]
    %v998 = vld [vmem:[%s975 + $0x58] sm:$0xf]
    %v999 = vld [vmem:[%s975 + $0x5c] sm:$0xf]
    %v1000 = vld [vmem:[%s975 + $0x60] sm:$0xf]
    %v1001 = vld [vmem:[%s975 + $0x64] sm:$0xf]
    %v1002 = vld [vmem:[%s975 + $0x68] sm:$0xf]
    %v1003 = vld [vmem:[%s975 + $0x6c] sm:$0xf]
    %v1004 = vld [vmem:[%s975 + $0x70] sm:$0xf]
    %v1005 = vld [vmem:[%s975 + $0x74] sm:$0xf]
    %v1006 = vld [vmem:[%s975 + $0x78] sm:$0xf]
    %v1007 = vld [vmem:[%s975 + $0x7c] sm:$0xf]
    %v1040 = vunpack.c.l.b16 %v976
    %v1041 = vunpack.c.l.b16 %v977
    %v1042 = vunpack.c.l.b16 %v978
    %v1043 = vunpack.c.l.b16 %v979
    %v1044 = vunpack.c.l.b16 %v980
    %v1045 = vunpack.c.l.b16 %v981
    %v1046 = vunpack.c.l.b16 %v982
    %v1047 = vunpack.c.l.b16 %v983
    %v1048 = vunpack.c.l.b16 %v984
    %v1049 = vunpack.c.l.b16 %v985
    %v1050 = vunpack.c.l.b16 %v986
    %v1051 = vunpack.c.l.b16 %v987
    %v1052 = vunpack.c.l.b16 %v988
    %v1053 = vunpack.c.l.b16 %v989
    %v1054 = vunpack.c.l.b16 %v990
    %v1055 = vunpack.c.l.b16 %v991
    %v1056 = vunpack.c.l.b16 %v992
    %v1057 = vunpack.c.l.b16 %v993
    %v1058 = vunpack.c.l.b16 %v994
    %v1059 = vunpack.c.l.b16 %v995
    %v1060 = vunpack.c.l.b16 %v996
    %v1061 = vunpack.c.l.b16 %v997
    %v1062 = vunpack.c.l.b16 %v998
    %v1063 = vunpack.c.l.b16 %v999
    %v1064 = vunpack.c.l.b16 %v1000
    %v1065 = vunpack.c.l.b16 %v1001
    %v1066 = vunpack.c.l.b16 %v1002
    %v1067 = vunpack.c.l.b16 %v1003
    %v1068 = vunpack.c.l.b16 %v1004
    %v1069 = vunpack.c.l.b16 %v1005
    %v1070 = vunpack.c.l.b16 %v1006
    %v1071 = vunpack.c.l.b16 %v1007
    %v1072 = vpack.c.b16 %v1041, %v1040
    %v1073 = vpack.c.b16 %v1043, %v1042
    %v1074 = vpack.c.b16 %v1045, %v1044
    %v1075 = vpack.c.b16 %v1047, %v1046
    %v1076 = vpack.c.b16 %v1049, %v1048
    %v1077 = vpack.c.b16 %v1051, %v1050
    %v1078 = vpack.c.b16 %v1053, %v1052
    %v1079 = vpack.c.b16 %v1055, %v1054
    %v1080 = vpack.c.b16 %v1057, %v1056
    %v1081 = vpack.c.b16 %v1059, %v1058
    %v1082 = vpack.c.b16 %v1061, %v1060
    %v1083 = vpack.c.b16 %v1063, %v1062
    %v1084 = vpack.c.b16 %v1065, %v1064
    %v1085 = vpack.c.b16 %v1067, %v1066
    %v1086 = vpack.c.b16 %v1069, %v1068
    %v1087 = vpack.c.b16 %v1071, %v1070
    %1104 = vmatprep.subr.bf16.mxu0 0
    %1105 = vmatpush1.bf16.msra.mxu0 %v1079
    %1106 = vmatprep.subr.bf16.mxu0 0
    %1107 = vmatpush1.bf16.msra.mxu0 %v1078
    %1108 = vmatprep.subr.bf16.mxu0 0
    %1109 = vmatpush1.bf16.msra.mxu0 %v1077
    %1110 = vmatprep.subr.bf16.mxu0 0
    %1111 = vmatpush1.bf16.msra.mxu0 %v1076
    %1112 = vmatprep.subr.bf16.mxu0 0
    %1113 = vmatpush1.bf16.msra.mxu0 %v1075
    %1114 = vmatprep.subr.bf16.mxu0 0
    %1115 = vmatpush1.bf16.msra.mxu0 %v1074
    %1116 = vmatprep.subr.bf16.mxu0 0
    %1117 = vmatpush1.bf16.msra.mxu0 %v1073
    %1118 = vmatprep.subr.bf16.mxu0 0
    %1119 = vmatpush1.bf16.msra.mxu0 %v1072
    %1120 = vmatprep.subr.bf16.mxu0 0
    %1121 = vmatpush2.bf16.msra.mxu0 %v1087
    %1122 = vmatprep.subr.bf16.mxu0 0
    %1123 = vmatpush2.bf16.msra.mxu0 %v1086
    %1124 = vmatprep.subr.bf16.mxu0 0
    %1125 = vmatpush2.bf16.msra.mxu0 %v1085
    %1126 = vmatprep.subr.bf16.mxu0 0
    %1127 = vmatpush2.bf16.msra.mxu0 %v1084
    %1128 = vmatprep.subr.bf16.mxu0 0
    %1129 = vmatpush2.bf16.msra.mxu0 %v1083
    %1130 = vmatprep.subr.bf16.mxu0 0
    %1131 = vmatpush2.bf16.msra.mxu0 %v1082
    %1132 = vmatprep.subr.bf16.mxu0 0
    %1133 = vmatpush2.bf16.msra.mxu0 %v1081
    %1134 = vmatprep.subr.bf16.mxu0 0
    %1135 = vmatpush2.bf16.msra.mxu0 %v1080
    %1136 = vmatprep.mubr.bf16.mxu0 %v691
    %1137 = vmatmul.mubr.bf16.gmra.mxu0 %v690
    %v1138 = vpop.f32.mrf.mxu0
    %v1139 = vadd.f32 0.0, %v1138
    %v1140 = vpop.f32.mrf.mxu0
    %v1141 = vpop.f32.mrf.mxu0
    %v1142 = vpop.f32.mrf.mxu0
    %1143 = vdwg.mxu0
    %v1176 = vunpack.c.l.b16 %v943
    %v1177 = vunpack.c.l.b16 %v944
    %v1178 = vunpack.c.l.b16 %v945
    %v1179 = vunpack.c.l.b16 %v946
    %v1180 = vunpack.c.l.b16 %v947
    %v1181 = vunpack.c.l.b16 %v948
    %v1182 = vunpack.c.l.b16 %v949
    %v1183 = vunpack.c.l.b16 %v950
    %v1184 = vunpack.c.l.b16 %v951
    %v1185 = vunpack.c.l.b16 %v952
    %v1186 = vunpack.c.l.b16 %v953
    %v1187 = vunpack.c.l.b16 %v954
    %v1188 = vunpack.c.l.b16 %v955
    %v1189 = vunpack.c.l.b16 %v956
    %v1190 = vunpack.c.l.b16 %v957
    %v1191 = vunpack.c.l.b16 %v958
    %v1192 = vunpack.c.l.b16 %v959
    %v1193 = vunpack.c.l.b16 %v960
    %v1194 = vunpack.c.l.b16 %v961
    %v1195 = vunpack.c.l.b16 %v962
    %v1196 = vunpack.c.l.b16 %v963
    %v1197 = vunpack.c.l.b16 %v964
    %v1198 = vunpack.c.l.b16 %v965
    %v1199 = vunpack.c.l.b16 %v966
    %v1200 = vunpack.c.l.b16 %v967
    %v1201 = vunpack.c.l.b16 %v968
    %v1202 = vunpack.c.l.b16 %v969
    %v1203 = vunpack.c.l.b16 %v970
    %v1204 = vunpack.c.l.b16 %v971
    %v1205 = vunpack.c.l.b16 %v972
    %v1206 = vunpack.c.l.b16 %v973
    %v1207 = vunpack.c.l.b16 %v974
    %v1208 = vpack.c.b16 %v1177, %v1176
    %v1209 = vpack.c.b16 %v1179, %v1178
    %v1210 = vpack.c.b16 %v1181, %v1180
    %v1211 = vpack.c.b16 %v1183, %v1182
    %v1212 = vpack.c.b16 %v1185, %v1184
    %v1213 = vpack.c.b16 %v1187, %v1186
    %v1214 = vpack.c.b16 %v1189, %v1188
    %v1215 = vpack.c.b16 %v1191, %v1190
    %v1216 = vpack.c.b16 %v1193, %v1192
    %v1217 = vpack.c.b16 %v1195, %v1194
    %v1218 = vpack.c.b16 %v1197, %v1196
    %v1219 = vpack.c.b16 %v1199, %v1198
    %v1220 = vpack.c.b16 %v1201, %v1200
    %v1221 = vpack.c.b16 %v1203, %v1202
    %v1222 = vpack.c.b16 %v1205, %v1204
    %v1223 = vpack.c.b16 %v1207, %v1206
    %1240 = vmatprep.subr.bf16.mxu0 0
    %1241 = vmatpush1.bf16.msra.mxu0 %v1215
    %1242 = vmatprep.subr.bf16.mxu0 0
    %1243 = vmatpush1.bf16.msra.mxu0 %v1214
    %1244 = vmatprep.subr.bf16.mxu0 0
    %1245 = vmatpush1.bf16.msra.mxu0 %v1213
    %1246 = vmatprep.subr.bf16.mxu0 0
    %1247 = vmatpush1.bf16.msra.mxu0 %v1212
    %1248 = vmatprep.subr.bf16.mxu0 0
    %1249 = vmatpush1.bf16.msra.mxu0 %v1211
    %1250 = vmatprep.subr.bf16.mxu0 0
    %1251 = vmatpush1.bf16.msra.mxu0 %v1210
    %1252 = vmatprep.subr.bf16.mxu0 0
    %1253 = vmatpush1.bf16.msra.mxu0 %v1209
    %1254 = vmatprep.subr.bf16.mxu0 0
    %1255 = vmatpush1.bf16.msra.mxu0 %v1208
    %1256 = vmatprep.subr.bf16.mxu0 0
    %1257 = vmatpush2.bf16.msra.mxu0 %v1223
    %1258 = vmatprep.subr.bf16.mxu0 0
    %1259 = vmatpush2.bf16.msra.mxu0 %v1222
    %1260 = vmatprep.subr.bf16.mxu0 0
    %1261 = vmatpush2.bf16.msra.mxu0 %v1221
    %1262 = vmatprep.subr.bf16.mxu0 0
    %1263 = vmatpush2.bf16.msra.mxu0 %v1220
    %1264 = vmatprep.subr.bf16.mxu0 0
    %1265 = vmatpush2.bf16.msra.mxu0 %v1219
    %1266 = vmatprep.subr.bf16.mxu0 0
    %1267 = vmatpush2.bf16.msra.mxu0 %v1218
    %1268 = vmatprep.subr.bf16.mxu0 0
    %1269 = vmatpush2.bf16.msra.mxu0 %v1217
    %1270 = vmatprep.subr.bf16.mxu0 0
    %1271 = vmatpush2.bf16.msra.mxu0 %v1216
    %1272 = vmatprep.mubr.bf16.mxu0 %v942
    %1273 = vmatmul.mubr.bf16.gmra.mxu0 %v941
    %v1274 = vpop.f32.mrf.mxu0
    %v1275 = vadd.f32 %v1139, %v1274
    %v1276 = vpop.f32.mrf.mxu0
    %v1277 = vpop.f32.mrf.mxu0
    %v1278 = vpop.f32.mrf.mxu0
    %1279 = vdwg.mxu0
    %v1280 = vld [vmem:[%s5] sm:$0x1]
    %v1282 = vlaneseq
    %v1283 = vshrl.u32 %v1282, 7
    %v1284 = vsub.s32 0, %v1283
    %v1285 = vrot.slane %v1280, %v1284
    %v1287 = vadd.f32 %v1275, %v1285
    %1288 = vst [vmem:[#allocation11] sm:$0xff] %v1287
    // Predicated region
    $region46: #{tpu_custom_call.1} parent=1 // pred_check
      _
    $region47: #{tpu_custom_call.1} parent=1 // pred_check_branch
      %1290 = sbr.rel (0) target = $region49
    $region48: #{tpu_custom_call.1} parent=1 // pred_region
      %s1292 = ssub.s32 128, 128
      %1293 = vsyncadd [#allocation4], %s1292
      %s1295 = sshll.u32 [#allocation11], 4
      %s1296 = int_to_ptr.vmem [resolvable:$true] %s1295
      %1298 = dma.vmem_to_hbm [thread:$0]  %s1296, 128, %s6, [#allocation4]
    $region49: #{tpu_custom_call.1} parent=1 // pred_fallthru
      _
    // Predicated region
    $region50: #{tpu_custom_call.1} parent=1 // pred_check
      _
    $region51: #{tpu_custom_call.1} parent=1 // pred_check_branch
      %1300 = sbr.rel (0) target = $region53
    $region52: #{tpu_custom_call.1} parent=1 // pred_region
      %1301 = dma.done [#allocation4], 128
    $region53: #{tpu_custom_call.1} parent=1 // pred_fallthru
      _
    %1302 = vsyncpa [#allocation3], 1
    %1303 = vsyncpa [#allocation6], 1
    %1304 = vsyncpa [#allocation9], 1
    %1305 = vsyncpa [#allocation4], 1

</llo_original>
